<compile_context>
chip_gen: v6e
topology: v6e:2x2x1
jax: 0.10.0
libtpu: 0.0.40
codegen_flags: <defaults>
</compile_context>

<pallas_src>
import jax
import jax.numpy as jnp
import numpy as np
from jax.experimental import pallas as pl
from jax.experimental.pallas import tpu as pltpu  # noqa: F401  (TPU backend)


# ----------------------------- config (small, consistent with the module) ----
N_LAYER = 3
N_EMBD = 32
N_HEAD = 4
HEAD_DIM = N_EMBD // N_HEAD          # 8
LATENT = 16                          # vae_config.latent_size
H2 = 2 * N_EMBD                      # 64  (input dim of hidden2mean/hidden2logv)
BATCH = 2
SEQ = 8
KDIM = 2 * N_HEAD * SEQ * HEAD_DIM   # 512 = flattened (2, n_head, S, head_dim)
OUT_LANES = 128                      # lane-dense output slab width


# ----------------------------- fused VAE kernel -------------------------------
def vae_kernel(x_ref, w_ref, b_ref, slab_ref, past_ref):
    # x_ref:   [B, KDIM]       pure reshape of encoder_presents[-2]
    # w_ref:   [KDIM, 128]     fused [W_hidden | W_mean | W_logv | 0]
    # b_ref:   [1, 128]        fused [b_hidden | b_mean | b_logv | 0]
    # slab_ref:[B, 128]        lane-dense output [hidden(64)|mean(16)|logv(16)|pad(32)]
    # past_ref:[n_layer, B, H2] flattened zero "past"; layer -2 row = hidden

    # whole bottleneck (pool + hidden2mean + hidden2logv + latent2hidden with
    # z == mean) as ONE MXU matmul, one unmasked full-width store.
    slab = jnp.dot(x_ref[...], w_ref[...],
                   preferred_element_type=jnp.float32) + b_ref[...]
    slab_ref[...] = slab

    # zero "past" produced in-kernel; hidden lanes go to layer -2
    past_ref[...] = jnp.zeros_like(past_ref)
    past_ref[N_LAYER - 2, :, :] = slab[:, 0:H2]


def run_vae(x_flat, w_all, b_all):
    """x_flat: [B, KDIM] f32.  Returns (slab [B,128], past_flat [n_layer,B,H2])."""
    B = x_flat.shape[0]
    out_shape = (
        jax.ShapeDtypeStruct((B, OUT_LANES), jnp.float32),    # [hidden|mean|logv|pad]
        jax.ShapeDtypeStruct((N_LAYER, B, H2), jnp.float32),  # flattened "past"
    )
    # No grid: every operand is tiny and lives whole in VMEM (default BlockSpecs).
    return pl.pallas_call(vae_kernel, out_shape=out_shape)(x_flat, w_all, b_all)


# ----------------------------- full forward (VAE_GPT2.forward core) -----------
def vae_gpt2_forward(encoder_presents, kparams):
    """encoder_presents: [n_layer, B, 2, n_head, S, head_dim] (stacked presents).

    Mirrors VAE_GPT2.forward between the encoder and decoder calls.
    """
    w_all, b_all = kparams
    B = encoder_presents.shape[1]

    # second-to-last layer flattened row-major over (2, n_head, S, head_dim):
    # a pure reshape (no transpose, no extra HBM copy).  The mean over S is
    # folded into the fused projection weight consumed by the kernel.
    x_flat = encoder_presents[N_LAYER - 2].reshape(B, KDIM)

    slab, past_flat = run_vae(x_flat, w_all, b_all)

    mean = slab[:, H2:H2 + LATENT]
    logv = slab[:, H2 + LATENT:H2 + 2 * LATENT]
    z = mean                                    # reference hard-assigns z = mean
    past = past_flat.reshape(N_LAYER, B, 2, N_HEAD, 1, HEAD_DIM)

    # TODO(synk): GPT2Model encoder / GPT2LMHeadModel decoder are external
    # pretrained models (from_pretrained); decoder_lm_logits cannot be produced
    # here, so the constructed `past` tensor is returned in its place.
    return past, mean, logv, z


vae_gpt2_forward = jax.jit(vae_gpt2_forward)


# ----------------------------- parameters -------------------------------------
def init_params(key):
    """Torch-layout VAE parameters (nn.Linear stores weight as [out, in])."""
    ks = jax.random.split(key, 6)
    s_in = 1.0 / np.sqrt(H2)
    s_lat = 1.0 / np.sqrt(LATENT)
    wm = jax.random.normal(ks[0], (LATENT, H2), jnp.float32) * s_in
    bm = jax.random.normal(ks[1], (LATENT,), jnp.float32) * 0.01
    wv = jax.random.normal(ks[2], (LATENT, H2), jnp.float32) * s_in
    bv = jax.random.normal(ks[3], (LATENT,), jnp.float32) * 0.01
    wh = jax.random.normal(ks[4], (H2, LATENT), jnp.float32) * s_lat
    bh = jax.random.normal(ks[5], (H2,), jnp.float32) * 0.01
    return wm, bm, wv, bv, wh, bh


def prepare_kernel_params(params):
    """One-time (offline) weight prep composing the whole bottleneck:
      * fuse hidden2mean / hidden2logv into one [H2, 2L] weight,
      * fold the sequence mean-pool into it (expand over S, scale by 1/S) so
        the kernel can consume the un-transposed, un-pooled activations,
      * compose latent2hidden on top of the mean path (z == mean, dead
        reparameterization removed):  hidden = x @ (Wmean_exp @ Wh^T) + (bm@Wh^T+bh),
      * pack [hidden | mean | logv | 0] columns into one lane-dense [KDIM,128]
        weight and [1,128] bias so the kernel is a single matmul + store.
    """
    wm, bm, wv, bv, wh, bh = params

    # fused mean/logv projection in h-space: [H2, 2L]
    wmv = jnp.concatenate([wm.T, wv.T], axis=1)
    # fold the mean-pool over S: expand over S, scale 1/S  -> [KDIM, 2L]
    wmv3 = wmv.reshape(2 * N_HEAD, HEAD_DIM, 2 * LATENT)
    wmv_exp = jnp.broadcast_to(
        wmv3[:, None, :, :] / SEQ,
        (2 * N_HEAD, SEQ, HEAD_DIM, 2 * LATENT)).reshape(KDIM, 2 * LATENT)

    # compose latent2hidden over the mean path
    w_hidden = wmv_exp[:, :LATENT] @ wh.T          # [KDIM, H2]
    b_hidden = bm @ wh.T + bh                      # [H2]
    bmv = jnp.concatenate([bm, bv])                # [2L]

    w_all = jnp.zeros((KDIM, OUT_LANES), jnp.float32)
    w_all = w_all.at[:, 0:H2].set(w_hidden)
    w_all = w_all.at[:, H2:H2 + 2 * LATENT].set(wmv_exp)
    b_all = jnp.zeros((1, OUT_LANES), jnp.float32)
    b_all = b_all.at[0, 0:H2].set(b_hidden)
    b_all = b_all.at[0, H2:H2 + 2 * LATENT].set(bmv)
    return w_all, b_all


# ----------------------------- plain-JAX reference ----------------------------
def reference_forward(encoder_presents, params):
    """Torch-faithful reference for correctness checking."""
    wm, bm, wv, bv, wh, bh = params
    B = encoder_presents.shape[1]
    h = encoder_presents[-2].mean(axis=-2).reshape(B, -1)             # [B, H2]
    mean = h @ wm.T + bm
    logv = h @ wv.T + bv
    z = mean                                # reparameterized sample is discarded
    hidden = z @ wh.T + bh
    past = jnp.zeros((N_LAYER, B, 2, N_HEAD, 1, HEAD_DIM), jnp.float32)
    past = past.at[N_LAYER - 2].set(hidden.reshape(B, 2, N_HEAD, 1, HEAD_DIM))
    return past, mean, logv, z


# ----------------------------- example run ------------------------------------
if __name__ == "__main__":
    key = jax.random.PRNGKey(0)
    k_presents, k_params = jax.random.split(key, 2)

    # synthetic stand-in for torch.stack(encoder_presents) from the GPT2 encoder
    encoder_presents = jax.random.normal(
        k_presents, (N_LAYER, BATCH, 2, N_HEAD, SEQ, HEAD_DIM), jnp.float32)
    params = init_params(k_params)
    kparams = prepare_kernel_params(params)

    past, mean, logv, z = jax.block_until_ready(
        vae_gpt2_forward(encoder_presents, kparams))

    past_r, mean_r, logv_r, z_r = reference_forward(encoder_presents, params)
    # tolerance accounts for MXU default-precision f32 matmul and the
    # different (weight-fused / pre-composed) summation order in the kernel
    tol = dict(rtol=3e-3, atol=3e-3)
    assert np.allclose(np.asarray(mean), np.asarray(mean_r), **tol)
    assert np.allclose(np.asarray(logv), np.asarray(logv_r), **tol)
    assert np.allclose(np.asarray(z), np.asarray(z_r), **tol)
    assert np.allclose(np.asarray(past), np.asarray(past_r), **tol)

    print("KERNEL_OK")
</pallas_src>

<mosaic_0001>
module attributes {stable_mosaic.version = 11 : i64} {
  func.func @vae_kernel(%arg0: memref<2x512xf32, #tpu.memory_space<vmem>>, %arg1: memref<512x128xf32, #tpu.memory_space<vmem>>, %arg2: memref<1x128xf32, #tpu.memory_space<vmem>>, %arg3: memref<2x128xf32, #tpu.memory_space<vmem>>, %arg4: memref<3x2x64xf32, #tpu.memory_space<vmem>>) attributes {dimension_semantics = [], scalar_prefetch = 0 : i64, scratch_operands = 0 : i64, tpu.core_type = #tpu.core_type<tc>} {
    %c0 = arith.constant 0 : index
    %c0_0 = arith.constant 0 : index
    %0 = vector.load %arg0[%c0, %c0_0] : memref<2x512xf32, #tpu.memory_space<vmem>>, vector<2x512xf32>
    %c0_1 = arith.constant 0 : index
    %c0_2 = arith.constant 0 : index
    %1 = vector.load %arg1[%c0_1, %c0_2] : memref<512x128xf32, #tpu.memory_space<vmem>>, vector<512x128xf32>
    %cst = arith.constant dense<0.000000e+00> : vector<2x128xf32>
    %2 = tpu.matmul %0, %1, %cst {dimension_numbers = #tpu.dot_dimension_numbers<[1], [0], [0], [1], [0, 0, 1, 1], [], []>} : vector<2x512xf32>, vector<512x128xf32>, vector<2x128xf32> -> vector<2x128xf32>
    %c0_3 = arith.constant 0 : index
    %c0_4 = arith.constant 0 : index
    %3 = vector.load %arg2[%c0_3, %c0_4] : memref<1x128xf32, #tpu.memory_space<vmem>>, vector<1x128xf32>
    %4 = vector.broadcast %3 : vector<1x128xf32> to vector<2x128xf32>
    %5 = arith.addf %2, %4 : vector<2x128xf32>
    %c0_5 = arith.constant 0 : index
    %c0_6 = arith.constant 0 : index
    %6 = vector.load %arg3[%c0_5, %c0_6] : memref<2x128xf32, #tpu.memory_space<vmem>>, vector<2x128xf32>
    tpu.vector_store %arg3[%c0_5, %c0_6], %5 {strides = array<i32>} : memref<2x128xf32, #tpu.memory_space<vmem>>, vector<2x128xf32>,
    %cst_7 = arith.constant 0.000000e+00 : f32
    %7 = vector.broadcast %cst_7 : f32 to vector<3x2x64xf32>
    %c0_8 = arith.constant 0 : index
    %c0_9 = arith.constant 0 : index
    %c0_10 = arith.constant 0 : index
    %8 = vector.load %arg4[%c0_8, %c0_9, %c0_10] : memref<3x2x64xf32, #tpu.memory_space<vmem>>, vector<3x2x64xf32>
    tpu.vector_store %arg4[%c0_8, %c0_9, %c0_10], %7 {strides = array<i32>} : memref<3x2x64xf32, #tpu.memory_space<vmem>>, vector<3x2x64xf32>,
    %9 = vector.extract_strided_slice %5 {offsets = [0, 0], sizes = [2, 64], strides = [1, 1]} : vector<2x128xf32> to vector<2x64xf32>
    %c1 = arith.constant 1 : index
    %c0_11 = arith.constant 0 : index
    %c0_12 = arith.constant 0 : index
    %10 = vector.load %arg4[%c1, %c0_11, %c0_12] : memref<3x2x64xf32, #tpu.memory_space<vmem>>, vector<1x2x64xf32>
    %11 = vector.shape_cast %10 : vector<1x2x64xf32> to vector<2x64xf32>
    %12 = vector.shape_cast %9 : vector<2x64xf32> to vector<1x2x64xf32>
    tpu.vector_store %arg4[%c1, %c0_11, %c0_12], %12 {strides = array<i32>} : memref<3x2x64xf32, #tpu.memory_space<vmem>>, vector<1x2x64xf32>,
    return
  }
}

</mosaic_0001>

<llo_original>
// kernel: squeeze.1
$region0: #{squeeze.1}
  %s0 = inlined_call_operand.vmem [shape: f32[1,2,2,4,8,8], index: 0, kind: input, shape index: {}]
  %s1 = inlined_call_operand.vmem [shape: f32[2,512], index: 1, kind: output, shape index: {}]
  $region1: #{squeeze.1} parent=0
    #allocation0 [shape = 'u8[16384]{0}', space=vmem, size = 0x4000, scoped, tag = 'scoped mem for output reshape']
    %s2 = smov 3
    %v3 = vld [vmem:[%s0] ss:$16 sm:%s2]
    %s4 = smov 12
    %v5 = vld [vmem:[%s0] ss:$16 sm:%s4]
    %vm6 = vcmask 1043458
    %v7 = vsel %vm6, %v5, %v3
    %s8 = smov 48
    %v9 = vld [vmem:[%s0] ss:$16 sm:%s8]
    %vm10 = vcmask 1045508
    %v11 = vsel %vm10, %v9, %v7
    %s12 = smov 192
    %v13 = vld [vmem:[%s0] ss:$16 sm:%s12]
    %vm14 = vcmask 1047558
    %v15 = vsel %vm14, %v13, %v11
    %vm16 = vcmask 64512
    %17 = vst.msk [vmem:[#allocation0] ss:$8 sm:$0xf] %vm16, %v15
    %s18 = scalar_lea.vmem [#allocation0], 4294967265
    %19 = vst.msk [vmem:[%s18] ss:$8 sm:$0xf0] %vm16, %v15
    %s20 = scalar_lea.vmem %s0, 15
    %v21 = vld [vmem:[%s20] sm:$0x1]
    %s22 = scalar_lea.vmem %s0, 127
    %s23 = smov 6
    %v24 = vld [vmem:[%s22] ss:$-48 sm:%s23]
    %vm25 = vcmask 1042433
    %v26 = vsel %vm25, %v24, %v21
    %s27 = scalar_lea.vmem %s0, 239
    %s28 = smov 24
    %v29 = vld [vmem:[%s27] ss:$-48 sm:%s28]
    %vm30 = vcmask 1044483
    %v31 = vsel %vm30, %v29, %v26
    %s32 = scalar_lea.vmem %s0, 351
    %s33 = smov 96
    %v34 = vld [vmem:[%s32] ss:$-48 sm:%s33]
    %vm35 = vcmask 1046533
    %v36 = vsel %vm35, %v34, %v31
    %s37 = scalar_lea.vmem %s0, 120
    %v38 = vld [vmem:[%s37] sm:$0x80]
    %vm39 = vcmask 1047559
    %v40 = vsel %vm39, %v38, %v36
    %41 = vrot.lane.b32.xlu0 %v40, 120
    %v42 = vpop.permute.xlu0 %41
    %vm43 = vcmask 1048512
    %44 = vst.msk [vmem:[#allocation0] sm:$0x3] %vm43, %v42
    %s45 = scalar_lea.vmem [#allocation0], 6
    %46 = vst.msk [vmem:[%s45] sm:$0xc] %vm43, %v42
    %s47 = scalar_lea.vmem [#allocation0], 12
    %48 = vst.msk [vmem:[%s47] sm:$0x30] %vm43, %v42
    %s49 = scalar_lea.vmem [#allocation0], 18
    %50 = vst.msk [vmem:[%s49] sm:$0xc0] %vm43, %v42
    %s51 = scalar_lea.vmem %s0, 14
    %v52 = vld [vmem:[%s51] sm:$0x1]
    %s53 = scalar_lea.vmem %s0, 126
    %s54 = smov 6
    %v55 = vld [vmem:[%s53] ss:$-48 sm:%s54]
    %vm56 = vcmask 1042433
    %v57 = vsel %vm56, %v55, %v52
    %s58 = scalar_lea.vmem %s0, 238
    %s59 = smov 24
    %v60 = vld [vmem:[%s58] ss:$-48 sm:%s59]
    %vm61 = vcmask 1044483
    %v62 = vsel %vm61, %v60, %v57
    %s63 = scalar_lea.vmem %s0, 350
    %s64 = smov 96
    %v65 = vld [vmem:[%s63] ss:$-48 sm:%s64]
    %vm66 = vcmask 1046533
    %v67 = vsel %vm66, %v65, %v62
    %s68 = scalar_lea.vmem %s0, 119
    %v69 = vld [vmem:[%s68] sm:$0x80]
    %vm70 = vcmask 1047559
    %v71 = vsel %vm70, %v69, %v67
    %72 = vrot.lane.b32.xlu0 %v71, 112
    %v73 = vpop.permute.xlu0 %72
    %vm74 = vcmask 982912
    %75 = vst.msk [vmem:[#allocation0] sm:$0x3] %vm74, %v73
    %s76 = scalar_lea.vmem [#allocation0], 6
    %77 = vst.msk [vmem:[%s76] sm:$0xc] %vm74, %v73
    %s78 = scalar_lea.vmem [#allocation0], 12
    %79 = vst.msk [vmem:[%s78] sm:$0x30] %vm74, %v73
    %s80 = scalar_lea.vmem [#allocation0], 18
    %81 = vst.msk [vmem:[%s80] sm:$0xc0] %vm74, %v73
    %s82 = scalar_lea.vmem %s0, 13
    %v83 = vld [vmem:[%s82] sm:$0x1]
    %s84 = scalar_lea.vmem %s0, 125
    %s85 = smov 6
    %v86 = vld [vmem:[%s84] ss:$-48 sm:%s85]
    %vm87 = vcmask 1042433
    %v88 = vsel %vm87, %v86, %v83
    %s89 = scalar_lea.vmem %s0, 237
    %s90 = smov 24
    %v91 = vld [vmem:[%s89] ss:$-48 sm:%s90]
    %vm92 = vcmask 1044483
    %v93 = vsel %vm92, %v91, %v88
    %s94 = scalar_lea.vmem %s0, 349
    %s95 = smov 96
    %v96 = vld [vmem:[%s94] ss:$-48 sm:%s95]
    %vm97 = vcmask 1046533
    %v98 = vsel %vm97, %v96, %v93
    %s99 = scalar_lea.vmem %s0, 118
    %v100 = vld [vmem:[%s99] sm:$0x80]
    %vm101 = vcmask 1047559
    %v102 = vsel %vm101, %v100, %v98
    %103 = vrot.lane.b32.xlu0 %v102, 104
    %v104 = vpop.permute.xlu0 %103
    %vm105 = vcmask 917312
    %106 = vst.msk [vmem:[#allocation0] sm:$0x3] %vm105, %v104
    %s107 = scalar_lea.vmem [#allocation0], 6
    %108 = vst.msk [vmem:[%s107] sm:$0xc] %vm105, %v104
    %s109 = scalar_lea.vmem [#allocation0], 12
    %110 = vst.msk [vmem:[%s109] sm:$0x30] %vm105, %v104
    %s111 = scalar_lea.vmem [#allocation0], 18
    %112 = vst.msk [vmem:[%s111] sm:$0xc0] %vm105, %v104
    %s113 = scalar_lea.vmem %s0, 12
    %v114 = vld [vmem:[%s113] sm:$0x1]
    %s115 = scalar_lea.vmem %s0, 124
    %s116 = smov 6
    %v117 = vld [vmem:[%s115] ss:$-48 sm:%s116]
    %vm118 = vcmask 1042433
    %v119 = vsel %vm118, %v117, %v114
    %s120 = scalar_lea.vmem %s0, 236
    %s121 = smov 24
    %v122 = vld [vmem:[%s120] ss:$-48 sm:%s121]
    %vm123 = vcmask 1044483
    %v124 = vsel %vm123, %v122, %v119
    %s125 = scalar_lea.vmem %s0, 348
    %s126 = smov 96
    %v127 = vld [vmem:[%s125] ss:$-48 sm:%s126]
    %vm128 = vcmask 1046533
    %v129 = vsel %vm128, %v127, %v124
    %s130 = scalar_lea.vmem %s0, 117
    %v131 = vld [vmem:[%s130] sm:$0x80]
    %vm132 = vcmask 1047559
    %v133 = vsel %vm132, %v131, %v129
    %134 = vrot.lane.b32.xlu0 %v133, 96
    %v135 = vpop.permute.xlu0 %134
    %vm136 = vcmask 851712
    %137 = vst.msk [vmem:[#allocation0] sm:$0x3] %vm136, %v135
    %s138 = scalar_lea.vmem [#allocation0], 6
    %139 = vst.msk [vmem:[%s138] sm:$0xc] %vm136, %v135
    %s140 = scalar_lea.vmem [#allocation0], 12
    %141 = vst.msk [vmem:[%s140] sm:$0x30] %vm136, %v135
    %s142 = scalar_lea.vmem [#allocation0], 18
    %143 = vst.msk [vmem:[%s142] sm:$0xc0] %vm136, %v135
    %s144 = scalar_lea.vmem %s0, 11
    %v145 = vld [vmem:[%s144] sm:$0x1]
    %s146 = scalar_lea.vmem %s0, 123
    %s147 = smov 6
    %v148 = vld [vmem:[%s146] ss:$-48 sm:%s147]
    %vm149 = vcmask 1042433
    %v150 = vsel %vm149, %v148, %v145
    %s151 = scalar_lea.vmem %s0, 235
    %s152 = smov 24
    %v153 = vld [vmem:[%s151] ss:$-48 sm:%s152]
    %vm154 = vcmask 1044483
    %v155 = vsel %vm154, %v153, %v150
    %s156 = scalar_lea.vmem %s0, 347
    %s157 = smov 96
    %v158 = vld [vmem:[%s156] ss:$-48 sm:%s157]
    %vm159 = vcmask 1046533
    %v160 = vsel %vm159, %v158, %v155
    %s161 = scalar_lea.vmem %s0, 116
    %v162 = vld [vmem:[%s161] sm:$0x80]
    %vm163 = vcmask 1047559
    %v164 = vsel %vm163, %v162, %v160
    %165 = vrot.lane.b32.xlu0 %v164, 88
    %v166 = vpop.permute.xlu0 %165
    %vm167 = vcmask 786112
    %168 = vst.msk [vmem:[#allocation0] sm:$0x3] %vm167, %v166
    %s169 = scalar_lea.vmem [#allocation0], 6
    %170 = vst.msk [vmem:[%s169] sm:$0xc] %vm167, %v166
    %s171 = scalar_lea.vmem [#allocation0], 12
    %172 = vst.msk [vmem:[%s171] sm:$0x30] %vm167, %v166
    %s173 = scalar_lea.vmem [#allocation0], 18
    %174 = vst.msk [vmem:[%s173] sm:$0xc0] %vm167, %v166
    %s175 = scalar_lea.vmem %s0, 10
    %v176 = vld [vmem:[%s175] sm:$0x1]
    %s177 = scalar_lea.vmem %s0, 122
    %s178 = smov 6
    %v179 = vld [vmem:[%s177] ss:$-48 sm:%s178]
    %vm180 = vcmask 1042433
    %v181 = vsel %vm180, %v179, %v176
    %s182 = scalar_lea.vmem %s0, 234
    %s183 = smov 24
    %v184 = vld [vmem:[%s182] ss:$-48 sm:%s183]
    %vm185 = vcmask 1044483
    %v186 = vsel %vm185, %v184, %v181
    %s187 = scalar_lea.vmem %s0, 346
    %s188 = smov 96
    %v189 = vld [vmem:[%s187] ss:$-48 sm:%s188]
    %vm190 = vcmask 1046533
    %v191 = vsel %vm190, %v189, %v186
    %s192 = scalar_lea.vmem %s0, 115
    %v193 = vld [vmem:[%s192] sm:$0x80]
    %vm194 = vcmask 1047559
    %v195 = vsel %vm194, %v193, %v191
    %196 = vrot.lane.b32.xlu0 %v195, 80
    %v197 = vpop.permute.xlu0 %196
    %vm198 = vcmask 720512
    %199 = vst.msk [vmem:[#allocation0] sm:$0x3] %vm198, %v197
    %s200 = scalar_lea.vmem [#allocation0], 6
    %201 = vst.msk [vmem:[%s200] sm:$0xc] %vm198, %v197
    %s202 = scalar_lea.vmem [#allocation0], 12
    %203 = vst.msk [vmem:[%s202] sm:$0x30] %vm198, %v197
    %s204 = scalar_lea.vmem [#allocation0], 18
    %205 = vst.msk [vmem:[%s204] sm:$0xc0] %vm198, %v197
    %s206 = scalar_lea.vmem %s0, 9
    %v207 = vld [vmem:[%s206] sm:$0x1]
    %s208 = scalar_lea.vmem %s0, 121
    %s209 = smov 6
    %v210 = vld [vmem:[%s208] ss:$-48 sm:%s209]
    %vm211 = vcmask 1042433
    %v212 = vsel %vm211, %v210, %v207
    %s213 = scalar_lea.vmem %s0, 233
    %s214 = smov 24
    %v215 = vld [vmem:[%s213] ss:$-48 sm:%s214]
    %vm216 = vcmask 1044483
    %v217 = vsel %vm216, %v215, %v212
    %s218 = scalar_lea.vmem %s0, 345
    %s219 = smov 96
    %v220 = vld [vmem:[%s218] ss:$-48 sm:%s219]
    %vm221 = vcmask 1046533
    %v222 = vsel %vm221, %v220, %v217
    %s223 = scalar_lea.vmem %s0, 114
    %v224 = vld [vmem:[%s223] sm:$0x80]
    %vm225 = vcmask 1047559
    %v226 = vsel %vm225, %v224, %v222
    %227 = vrot.lane.b32.xlu0 %v226, 72
    %v228 = vpop.permute.xlu0 %227
    %vm229 = vcmask 654912
    %230 = vst.msk [vmem:[#allocation0] sm:$0x3] %vm229, %v228
    %s231 = scalar_lea.vmem [#allocation0], 6
    %232 = vst.msk [vmem:[%s231] sm:$0xc] %vm229, %v228
    %s233 = scalar_lea.vmem [#allocation0], 12
    %234 = vst.msk [vmem:[%s233] sm:$0x30] %vm229, %v228
    %s235 = scalar_lea.vmem [#allocation0], 18
    %236 = vst.msk [vmem:[%s235] sm:$0xc0] %vm229, %v228
    %s237 = scalar_lea.vmem %s0, 8
    %v238 = vld [vmem:[%s237] sm:$0x1]
    %s239 = scalar_lea.vmem %s0, 120
    %s240 = smov 6
    %v241 = vld [vmem:[%s239] ss:$-48 sm:%s240]
    %vm242 = vcmask 1042433
    %v243 = vsel %vm242, %v241, %v238
    %s244 = scalar_lea.vmem %s0, 232
    %s245 = smov 24
    %v246 = vld [vmem:[%s244] ss:$-48 sm:%s245]
    %vm247 = vcmask 1044483
    %v248 = vsel %vm247, %v246, %v243
    %s249 = scalar_lea.vmem %s0, 344
    %s250 = smov 96
    %v251 = vld [vmem:[%s249] ss:$-48 sm:%s250]
    %vm252 = vcmask 1046533
    %v253 = vsel %vm252, %v251, %v248
    %s254 = scalar_lea.vmem %s0, 113
    %v255 = vld [vmem:[%s254] sm:$0x80]
    %vm256 = vcmask 1047559
    %v257 = vsel %vm256, %v255, %v253
    %258 = vrot.lane.b32.xlu0 %v257, 64
    %v259 = vpop.permute.xlu0 %258
    %vm260 = vcmask 589312
    %261 = vst.msk [vmem:[#allocation0] sm:$0x3] %vm260, %v259
    %s262 = scalar_lea.vmem [#allocation0], 6
    %263 = vst.msk [vmem:[%s262] sm:$0xc] %vm260, %v259
    %s264 = scalar_lea.vmem [#allocation0], 12
    %265 = vst.msk [vmem:[%s264] sm:$0x30] %vm260, %v259
    %s266 = scalar_lea.vmem [#allocation0], 18
    %267 = vst.msk [vmem:[%s266] sm:$0xc0] %vm260, %v259
    %s268 = scalar_lea.vmem %s0, 7
    %v269 = vld [vmem:[%s268] sm:$0x1]
    %s270 = scalar_lea.vmem %s0, 119
    %s271 = smov 6
    %v272 = vld [vmem:[%s270] ss:$-48 sm:%s271]
    %vm273 = vcmask 1042433
    %v274 = vsel %vm273, %v272, %v269
    %s275 = scalar_lea.vmem %s0, 231
    %s276 = smov 24
    %v277 = vld [vmem:[%s275] ss:$-48 sm:%s276]
    %vm278 = vcmask 1044483
    %v279 = vsel %vm278, %v277, %v274
    %s280 = scalar_lea.vmem %s0, 343
    %s281 = smov 96
    %v282 = vld [vmem:[%s280] ss:$-48 sm:%s281]
    %vm283 = vcmask 1046533
    %v284 = vsel %vm283, %v282, %v279
    %s285 = scalar_lea.vmem %s0, 112
    %v286 = vld [vmem:[%s285] sm:$0x80]
    %vm287 = vcmask 1047559
    %v288 = vsel %vm287, %v286, %v284
    %289 = vrot.lane.b32.xlu0 %v288, 56
    %v290 = vpop.permute.xlu0 %289
    %vm291 = vcmask 523712
    %292 = vst.msk [vmem:[#allocation0] sm:$0x3] %vm291, %v290
    %s293 = scalar_lea.vmem [#allocation0], 6
    %294 = vst.msk [vmem:[%s293] sm:$0xc] %vm291, %v290
    %s295 = scalar_lea.vmem [#allocation0], 12
    %296 = vst.msk [vmem:[%s295] sm:$0x30] %vm291, %v290
    %s297 = scalar_lea.vmem [#allocation0], 18
    %298 = vst.msk [vmem:[%s297] sm:$0xc0] %vm291, %v290
    %s299 = scalar_lea.vmem %s0, 6
    %v300 = vld [vmem:[%s299] sm:$0x1]
    %s301 = scalar_lea.vmem %s0, 118
    %s302 = smov 6
    %v303 = vld [vmem:[%s301] ss:$-48 sm:%s302]
    %vm304 = vcmask 1042433
    %v305 = vsel %vm304, %v303, %v300
    %s306 = scalar_lea.vmem %s0, 230
    %s307 = smov 24
    %v308 = vld [vmem:[%s306] ss:$-48 sm:%s307]
    %vm309 = vcmask 1044483
    %v310 = vsel %vm309, %v308, %v305
    %s311 = scalar_lea.vmem %s0, 342
    %s312 = smov 96
    %v313 = vld [vmem:[%s311] ss:$-48 sm:%s312]
    %vm314 = vcmask 1046533
    %v315 = vsel %vm314, %v313, %v310
    %s316 = scalar_lea.vmem %s0, 111
    %v317 = vld [vmem:[%s316] sm:$0x80]
    %vm318 = vcmask 1047559
    %v319 = vsel %vm318, %v317, %v315
    %320 = vrot.lane.b32.xlu0 %v319, 48
    %v321 = vpop.permute.xlu0 %320
    %vm322 = vcmask 458112
    %323 = vst.msk [vmem:[#allocation0] sm:$0x3] %vm322, %v321
    %s324 = scalar_lea.vmem [#allocation0], 6
    %325 = vst.msk [vmem:[%s324] sm:$0xc] %vm322, %v321
    %s326 = scalar_lea.vmem [#allocation0], 12
    %327 = vst.msk [vmem:[%s326] sm:$0x30] %vm322, %v321
    %s328 = scalar_lea.vmem [#allocation0], 18
    %329 = vst.msk [vmem:[%s328] sm:$0xc0] %vm322, %v321
    %s330 = scalar_lea.vmem %s0, 5
    %v331 = vld [vmem:[%s330] sm:$0x1]
    %s332 = scalar_lea.vmem %s0, 117
    %s333 = smov 6
    %v334 = vld [vmem:[%s332] ss:$-48 sm:%s333]
    %vm335 = vcmask 1042433
    %v336 = vsel %vm335, %v334, %v331
    %s337 = scalar_lea.vmem %s0, 229
    %s338 = smov 24
    %v339 = vld [vmem:[%s337] ss:$-48 sm:%s338]
    %vm340 = vcmask 1044483
    %v341 = vsel %vm340, %v339, %v336
    %s342 = scalar_lea.vmem %s0, 341
    %s343 = smov 96
    %v344 = vld [vmem:[%s342] ss:$-48 sm:%s343]
    %vm345 = vcmask 1046533
    %v346 = vsel %vm345, %v344, %v341
    %s347 = scalar_lea.vmem %s0, 110
    %v348 = vld [vmem:[%s347] sm:$0x80]
    %vm349 = vcmask 1047559
    %v350 = vsel %vm349, %v348, %v346
    %351 = vrot.lane.b32.xlu0 %v350, 40
    %v352 = vpop.permute.xlu0 %351
    %vm353 = vcmask 392512
    %354 = vst.msk [vmem:[#allocation0] sm:$0x3] %vm353, %v352
    %s355 = scalar_lea.vmem [#allocation0], 6
    %356 = vst.msk [vmem:[%s355] sm:$0xc] %vm353, %v352
    %s357 = scalar_lea.vmem [#allocation0], 12
    %358 = vst.msk [vmem:[%s357] sm:$0x30] %vm353, %v352
    %s359 = scalar_lea.vmem [#allocation0], 18
    %360 = vst.msk [vmem:[%s359] sm:$0xc0] %vm353, %v352
    %s361 = scalar_lea.vmem %s0, 4
    %v362 = vld [vmem:[%s361] sm:$0x1]
    %s363 = scalar_lea.vmem %s0, 116
    %s364 = smov 6
    %v365 = vld [vmem:[%s363] ss:$-48 sm:%s364]
    %vm366 = vcmask 1042433
    %v367 = vsel %vm366, %v365, %v362
    %s368 = scalar_lea.vmem %s0, 228
    %s369 = smov 24
    %v370 = vld [vmem:[%s368] ss:$-48 sm:%s369]
    %vm371 = vcmask 1044483
    %v372 = vsel %vm371, %v370, %v367
    %s373 = scalar_lea.vmem %s0, 340
    %s374 = smov 96
    %v375 = vld [vmem:[%s373] ss:$-48 sm:%s374]
    %vm376 = vcmask 1046533
    %v377 = vsel %vm376, %v375, %v372
    %s378 = scalar_lea.vmem %s0, 109
    %v379 = vld [vmem:[%s378] sm:$0x80]
    %vm380 = vcmask 1047559
    %v381 = vsel %vm380, %v379, %v377
    %382 = vrot.lane.b32.xlu0 %v381, 32
    %v383 = vpop.permute.xlu0 %382
    %vm384 = vcmask 326912
    %385 = vst.msk [vmem:[#allocation0] sm:$0x3] %vm384, %v383
    %s386 = scalar_lea.vmem [#allocation0], 6
    %387 = vst.msk [vmem:[%s386] sm:$0xc] %vm384, %v383
    %s388 = scalar_lea.vmem [#allocation0], 12
    %389 = vst.msk [vmem:[%s388] sm:$0x30] %vm384, %v383
    %s390 = scalar_lea.vmem [#allocation0], 18
    %391 = vst.msk [vmem:[%s390] sm:$0xc0] %vm384, %v383
    %s392 = scalar_lea.vmem %s0, 3
    %v393 = vld [vmem:[%s392] sm:$0x1]
    %s394 = scalar_lea.vmem %s0, 115
    %s395 = smov 6
    %v396 = vld [vmem:[%s394] ss:$-48 sm:%s395]
    %vm397 = vcmask 1042433
    %v398 = vsel %vm397, %v396, %v393
    %s399 = scalar_lea.vmem %s0, 227
    %s400 = smov 24
    %v401 = vld [vmem:[%s399] ss:$-48 sm:%s400]
    %vm402 = vcmask 1044483
    %v403 = vsel %vm402, %v401, %v398
    %s404 = scalar_lea.vmem %s0, 339
    %s405 = smov 96
    %v406 = vld [vmem:[%s404] ss:$-48 sm:%s405]
    %vm407 = vcmask 1046533
    %v408 = vsel %vm407, %v406, %v403
    %s409 = scalar_lea.vmem %s0, 108
    %v410 = vld [vmem:[%s409] sm:$0x80]
    %vm411 = vcmask 1047559
    %v412 = vsel %vm411, %v410, %v408
    %413 = vrot.lane.b32.xlu0 %v412, 24
    %v414 = vpop.permute.xlu0 %413
    %vm415 = vcmask 261312
    %416 = vst.msk [vmem:[#allocation0] sm:$0x3] %vm415, %v414
    %s417 = scalar_lea.vmem [#allocation0], 6
    %418 = vst.msk [vmem:[%s417] sm:$0xc] %vm415, %v414
    %s419 = scalar_lea.vmem [#allocation0], 12
    %420 = vst.msk [vmem:[%s419] sm:$0x30] %vm415, %v414
    %s421 = scalar_lea.vmem [#allocation0], 18
    %422 = vst.msk [vmem:[%s421] sm:$0xc0] %vm415, %v414
    %s423 = scalar_lea.vmem %s0, 2
    %v424 = vld [vmem:[%s423] sm:$0x1]
    %s425 = scalar_lea.vmem %s0, 114
    %s426 = smov 6
    %v427 = vld [vmem:[%s425] ss:$-48 sm:%s426]
    %vm428 = vcmask 1042433
    %v429 = vsel %vm428, %v427, %v424
    %s430 = scalar_lea.vmem %s0, 226
    %s431 = smov 24
    %v432 = vld [vmem:[%s430] ss:$-48 sm:%s431]
    %vm433 = vcmask 1044483
    %v434 = vsel %vm433, %v432, %v429
    %s435 = scalar_lea.vmem %s0, 338
    %s436 = smov 96
    %v437 = vld [vmem:[%s435] ss:$-48 sm:%s436]
    %vm438 = vcmask 1046533
    %v439 = vsel %vm438, %v437, %v434
    %s440 = scalar_lea.vmem %s0, 107
    %v441 = vld [vmem:[%s440] sm:$0x80]
    %vm442 = vcmask 1047559
    %v443 = vsel %vm442, %v441, %v439
    %444 = vrot.lane.b32.xlu0 %v443, 16
    %v445 = vpop.permute.xlu0 %444
    %vm446 = vcmask 195712
    %447 = vst.msk [vmem:[#allocation0] sm:$0x3] %vm446, %v445
    %s448 = scalar_lea.vmem [#allocation0], 6
    %449 = vst.msk [vmem:[%s448] sm:$0xc] %vm446, %v445
    %s450 = scalar_lea.vmem [#allocation0], 12
    %451 = vst.msk [vmem:[%s450] sm:$0x30] %vm446, %v445
    %s452 = scalar_lea.vmem [#allocation0], 18
    %453 = vst.msk [vmem:[%s452] sm:$0xc0] %vm446, %v445
    %s454 = scalar_lea.vmem %s0, 1
    %v455 = vld [vmem:[%s454] sm:$0x1]
    %s456 = scalar_lea.vmem %s0, 113
    %s457 = smov 6
    %v458 = vld [vmem:[%s456] ss:$-48 sm:%s457]
    %vm459 = vcmask 1042433
    %v460 = vsel %vm459, %v458, %v455
    %s461 = scalar_lea.vmem %s0, 225
    %s462 = smov 24
    %v463 = vld [vmem:[%s461] ss:$-48 sm:%s462]
    %vm464 = vcmask 1044483
    %v465 = vsel %vm464, %v463, %v460
    %s466 = scalar_lea.vmem %s0, 337
    %s467 = smov 96
    %v468 = vld [vmem:[%s466] ss:$-48 sm:%s467]
    %vm469 = vcmask 1046533
    %v470 = vsel %vm469, %v468, %v465
    %s471 = scalar_lea.vmem %s0, 106
    %v472 = vld [vmem:[%s471] sm:$0x80]
    %vm473 = vcmask 1047559
    %v474 = vsel %vm473, %v472, %v470
    %475 = vrot.lane.b32.xlu0 %v474, 8
    %v476 = vpop.permute.xlu0 %475
    %vm477 = vcmask 130112
    %478 = vst.msk [vmem:[#allocation0] sm:$0x3] %vm477, %v476
    %s479 = scalar_lea.vmem [#allocation0], 6
    %480 = vst.msk [vmem:[%s479] sm:$0xc] %vm477, %v476
    %s481 = scalar_lea.vmem [#allocation0], 12
    %482 = vst.msk [vmem:[%s481] sm:$0x30] %vm477, %v476
    %s483 = scalar_lea.vmem [#allocation0], 18
    %484 = vst.msk [vmem:[%s483] sm:$0xc0] %vm477, %v476
    %s486 = sshll.u32 1, 2
    %s487 = ssub.s32 %s486, 1
    %v489 = vld [vmem:[#allocation0] sm:%s487]
    %s490 = sshll.u32 1, 2
    %s491 = ssub.s32 %s490, 1
    %492 = vst [vmem:[%s1] sm:%s491] %v489
    %s493 = scalar_lea.vmem [#allocation0], 8
    %v494 = vld [vmem:[%s493] sm:%s487]
    %s495 = sshll.u32 1, 2
    %s496 = ssub.s32 %s495, 1
    %s497 = scalar_lea.vmem %s1, 2
    %498 = vst [vmem:[%s497] sm:%s496] %v494
    %s499 = scalar_lea.vmem [#allocation0], 16
    %v500 = vld [vmem:[%s499] sm:%s487]
    %s501 = sshll.u32 1, 2
    %s502 = ssub.s32 %s501, 1
    %s503 = smul.addr 2, 2
    %s504 = scalar_lea.vmem %s1, %s503
    %505 = vst [vmem:[%s504] sm:%s502] %v500
    %s506 = scalar_lea.vmem [#allocation0], 24
    %v507 = vld [vmem:[%s506] sm:%s487]
    %s508 = sshll.u32 1, 2
    %s509 = ssub.s32 %s508, 1
    %s510 = smul.addr 2, 3
    %s511 = scalar_lea.vmem %s1, %s510
    %512 = vst [vmem:[%s511] sm:%s509] %v507

// kernel: vae_gpt2_forward.1
$region0: #{vae_gpt2_forward.1}
  #allocation0 [shape = 'u32[]', space=smem, size = 0x4, offset = 0x4, fixed_abs, tag = 'smem constant byte address 0x4 - core index']
  #allocation1 [shape = 'u32[144,128]{1,0:T(1,128)}', space=vmem, size = 0x12000, scoped, tag = 'internal scratch']
  %s0 = inlined_call_operand.vmem [shape: f32[2,512], index: 0, kind: input, shape index: {}]
  %s1 = inlined_call_operand.hbm [shape: f32[512,128], index: 1, kind: input, shape index: {}]
  %s2 = inlined_call_operand.vmem [shape: f32[1,128], index: 2, kind: input, shape index: {}]
  %s3 = inlined_call_operand.vmem [shape: f32[2,128], index: 3, kind: output, shape index: {0}]
  %s4 = inlined_call_operand.vmem [shape: f32[3,2,64], index: 4, kind: output, shape index: {1}]
  %5 = xla_tuple %s3, %s4
  %s6 = sld [smem:[#allocation0]]
  $region34: #{vae_gpt2_forward.1} parent=0
    _
  %s8 = ssub.s32 1, %s6
  %s9 = scalar_select 0, %s8, %s6
  $region1: #{vae_gpt2_forward.1} parent=0
    #allocation2 [shape = 'u8[262144]{0}', space=vmem, size = 0x40000, scoped, tag = 'input window, operand 1, single buffered']
    #allocation3 [shape = 's32[1]{0}', space=sflag, size = 0x4, scoped, tag = 'scoped memory for vae_gpt2_forward.1']
    %10 = vsyncpa [#allocation3], 0
    // Predicated region
    $region2: #{vae_gpt2_forward.1} parent=1 // pred_check
      _
    $region3: #{vae_gpt2_forward.1} parent=1 // pred_check_branch
      %12 = sbr.rel (0) target = $region5
    $region4: #{vae_gpt2_forward.1} parent=1 // pred_region
      _
    $region5: #{vae_gpt2_forward.1} parent=1 // pred_fallthru
      _
    // Predicated region
    $region6: #{vae_gpt2_forward.1} parent=1 // pred_check
      _
    $region7: #{vae_gpt2_forward.1} parent=1 // pred_check_branch
      %14 = sbr.rel (0) target = $region9
    $region8: #{vae_gpt2_forward.1} parent=1 // pred_region
      %s16 = ssub.s32 8192, 8192
      %17 = vsyncadd [#allocation3], %s16
      %s18 = sshll.u32 [#allocation2], 4
      %s19 = int_to_ptr.vmem [resolvable:$true] %s18
      %24 = dma.hbm_to_vmem [thread:$0]  %s1, 8192, %s19, [#allocation3], 128, 128, 8
    $region9: #{vae_gpt2_forward.1} parent=1 // pred_fallthru
      _
    // Predicated region
    $region10: #{vae_gpt2_forward.1} parent=1 // pred_check
      _
    $region11: #{vae_gpt2_forward.1} parent=1 // pred_check_branch
      %26 = sbr.rel (0) target = $region13
    $region12: #{vae_gpt2_forward.1} parent=1 // pred_region
      _
    $region13: #{vae_gpt2_forward.1} parent=1 // pred_fallthru
      _
    // Predicated region
    $region14: #{vae_gpt2_forward.1} parent=1 // pred_check
      _
    $region15: #{vae_gpt2_forward.1} parent=1 // pred_check_branch
      %28 = sbr.rel (0) target = $region17
    $region16: #{vae_gpt2_forward.1} parent=1 // pred_region
      %29 = dma.done [#allocation3], 8192
    $region17: #{vae_gpt2_forward.1} parent=1 // pred_fallthru
      _
    %v30 = vld [vmem:[%s0] sm:$0xff]
    %v31 = vld [vmem:[#allocation2] sm:$0xff]
    %v32 = vld [vmem:[#allocation2 + $0x8] sm:$0xff]
    %v33 = vld [vmem:[#allocation2 + $0x10] sm:$0xff]
    %v34 = vld [vmem:[#allocation2 + $0x18] sm:$0xff]
    %v35 = vld [vmem:[#allocation2 + $0x20] sm:$0xff]
    %v36 = vld [vmem:[#allocation2 + $0x28] sm:$0xff]
    %v37 = vld [vmem:[#allocation2 + $0x30] sm:$0xff]
    %v38 = vld [vmem:[#allocation2 + $0x38] sm:$0xff]
    %v39 = vld [vmem:[#allocation2 + $0x40] sm:$0xff]
    %v40 = vld [vmem:[#allocation2 + $0x48] sm:$0xff]
    %v41 = vld [vmem:[#allocation2 + $0x50] sm:$0xff]
    %v42 = vld [vmem:[#allocation2 + $0x58] sm:$0xff]
    %v43 = vld [vmem:[#allocation2 + $0x60] sm:$0xff]
    %v44 = vld [vmem:[#allocation2 + $0x68] sm:$0xff]
    %v45 = vld [vmem:[#allocation2 + $0x70] sm:$0xff]
    %v46 = vld [vmem:[#allocation2 + $0x78] sm:$0xff]
    %v47 = vld [vmem:[#allocation2 + $0x80] sm:$0xff]
    %v48 = vld [vmem:[#allocation2 + $0x88] sm:$0xff]
    %v49 = vld [vmem:[#allocation2 + $0x90] sm:$0xff]
    %v50 = vld [vmem:[#allocation2 + $0x98] sm:$0xff]
    %v51 = vld [vmem:[#allocation2 + $0xa0] sm:$0xff]
    %v52 = vld [vmem:[#allocation2 + $0xa8] sm:$0xff]
    %v53 = vld [vmem:[#allocation2 + $0xb0] sm:$0xff]
    %v54 = vld [vmem:[#allocation2 + $0xb8] sm:$0xff]
    %v55 = vld [vmem:[#allocation2 + $0xc0] sm:$0xff]
    %v56 = vld [vmem:[#allocation2 + $0xc8] sm:$0xff]
    %v57 = vld [vmem:[#allocation2 + $0xd0] sm:$0xff]
    %v58 = vld [vmem:[#allocation2 + $0xd8] sm:$0xff]
    %v59 = vld [vmem:[#allocation2 + $0xe0] sm:$0xff]
    %v60 = vld [vmem:[#allocation2 + $0xe8] sm:$0xff]
    %v61 = vld [vmem:[#allocation2 + $0xf0] sm:$0xff]
    %v62 = vld [vmem:[#allocation2 + $0xf8] sm:$0xff]
    %v63 = vld [vmem:[#allocation2 + $0x100] sm:$0xff]
    %v64 = vld [vmem:[#allocation2 + $0x108] sm:$0xff]
    %v65 = vld [vmem:[#allocation2 + $0x110] sm:$0xff]
    %v66 = vld [vmem:[#allocation2 + $0x118] sm:$0xff]
    %v67 = vld [vmem:[#allocation2 + $0x120] sm:$0xff]
    %v68 = vld [vmem:[#allocation2 + $0x128] sm:$0xff]
    %v69 = vld [vmem:[#allocation2 + $0x130] sm:$0xff]
    %v70 = vld [vmem:[#allocation2 + $0x138] sm:$0xff]
    %v71 = vld [vmem:[#allocation2 + $0x140] sm:$0xff]
    %v72 = vld [vmem:[#allocation2 + $0x148] sm:$0xff]
    %v73 = vld [vmem:[#allocation2 + $0x150] sm:$0xff]
    %v74 = vld [vmem:[#allocation2 + $0x158] sm:$0xff]
    %v75 = vld [vmem:[#allocation2 + $0x160] sm:$0xff]
    %v76 = vld [vmem:[#allocation2 + $0x168] sm:$0xff]
    %v77 = vld [vmem:[#allocation2 + $0x170] sm:$0xff]
    %v78 = vld [vmem:[#allocation2 + $0x178] sm:$0xff]
    %v79 = vld [vmem:[#allocation2 + $0x180] sm:$0xff]
    %v80 = vld [vmem:[#allocation2 + $0x188] sm:$0xff]
    %v81 = vld [vmem:[#allocation2 + $0x190] sm:$0xff]
    %v82 = vld [vmem:[#allocation2 + $0x198] sm:$0xff]
    %v83 = vld [vmem:[#allocation2 + $0x1a0] sm:$0xff]
    %v84 = vld [vmem:[#allocation2 + $0x1a8] sm:$0xff]
    %v85 = vld [vmem:[#allocation2 + $0x1b0] sm:$0xff]
    %v86 = vld [vmem:[#allocation2 + $0x1b8] sm:$0xff]
    %v87 = vld [vmem:[#allocation2 + $0x1c0] sm:$0xff]
    %v88 = vld [vmem:[#allocation2 + $0x1c8] sm:$0xff]
    %v89 = vld [vmem:[#allocation2 + $0x1d0] sm:$0xff]
    %v90 = vld [vmem:[#allocation2 + $0x1d8] sm:$0xff]
    %v91 = vld [vmem:[#allocation2 + $0x1e0] sm:$0xff]
    %v92 = vld [vmem:[#allocation2 + $0x1e8] sm:$0xff]
    %v93 = vld [vmem:[#allocation2 + $0x1f0] sm:$0xff]
    %v94 = vld [vmem:[#allocation2 + $0x1f8] sm:$0xff]
    %v95 = vld [vmem:[%s2] sm:$0x1]
    %v97 = vlaneseq
    %v98 = vshrl.u32 %v97, 7
    %v99 = vsub.s32 0, %v98
    %v100 = vrot.slane %v95, %v99
    %v103 = vcombine.high %v30, %v30
    %v105 = vunpack.c.l.s4 1983009808
    %v106 = vunpack.c.0.s8 %v105
    %v107 = vlaneseq
    %v108 = vshrl.u32 %v107, 7
    %v109 = vsub.s32 %v106, %v108
    %v110 = vrot.slane %v30, %v109
    %v112 = vunpack.c.l.s4 1983009808
    %v113 = vunpack.c.0.s8 %v112
    %v114 = vlaneseq
    %v115 = vshrl.u32 %v114, 7
    %v116 = vsub.s32 %v113, %v115
    %v117 = vrot.slane %v103, %v116
    %v118 = vcombine.high %v110, %v110
    %v119 = vcombine.high %v117, %v117
    %124 = vmatprep.subr.mxu0 0.0
    %125 = vmatpush1.msra.mxu0 %v46
    %126 = vmatprep.subr.mxu0 0.0
    %127 = vmatpush1.msra.mxu0 %v45
    %128 = vmatprep.subr.mxu0 0.0
    %129 = vmatpush1.msra.mxu0 %v44
    %130 = vmatprep.subr.mxu0 0.0
    %131 = vmatpush1.msra.mxu0 %v43
    %132 = vmatprep.subr.mxu0 0.0
    %133 = vmatpush1.msra.mxu0 %v42
    %134 = vmatprep.subr.mxu0 0.0
    %135 = vmatpush1.msra.mxu0 %v41
    %136 = vmatprep.subr.mxu0 0.0
    %137 = vmatpush1.msra.mxu0 %v40
    %138 = vmatprep.subr.mxu0 0.0
    %139 = vmatpush1.msra.mxu0 %v39
    %140 = vmatprep.subr.mxu0 0.0
    %141 = vmatpush1.msra.mxu0 %v38
    %142 = vmatprep.subr.mxu0 0.0
    %143 = vmatpush1.msra.mxu0 %v37
    %144 = vmatprep.subr.mxu0 0.0
    %145 = vmatpush1.msra.mxu0 %v36
    %146 = vmatprep.subr.mxu0 0.0
    %147 = vmatpush1.msra.mxu0 %v35
    %148 = vmatprep.subr.mxu0 0.0
    %149 = vmatpush1.msra.mxu0 %v34
    %150 = vmatprep.subr.mxu0 0.0
    %151 = vmatpush1.msra.mxu0 %v33
    %152 = vmatprep.subr.mxu0 0.0
    %153 = vmatpush1.msra.mxu0 %v32
    %154 = vmatprep.subr.mxu0 0.0
    %155 = vmatpush1.msra.mxu0 %v31
    %156 = vmatprep.subr.mxu0 0.0
    %157 = vmatpush2.msra.mxu0 %v62
    %158 = vmatprep.subr.mxu0 0.0
    %159 = vmatpush2.msra.mxu0 %v61
    %160 = vmatprep.subr.mxu0 0.0
    %161 = vmatpush2.msra.mxu0 %v60
    %162 = vmatprep.subr.mxu0 0.0
    %163 = vmatpush2.msra.mxu0 %v59
    %164 = vmatprep.subr.mxu0 0.0
    %165 = vmatpush2.msra.mxu0 %v58
    %166 = vmatprep.subr.mxu0 0.0
    %167 = vmatpush2.msra.mxu0 %v57
    %168 = vmatprep.subr.mxu0 0.0
    %169 = vmatpush2.msra.mxu0 %v56
    %170 = vmatprep.subr.mxu0 0.0
    %171 = vmatpush2.msra.mxu0 %v55
    %172 = vmatprep.subr.mxu0 0.0
    %173 = vmatpush2.msra.mxu0 %v54
    %174 = vmatprep.subr.mxu0 0.0
    %175 = vmatpush2.msra.mxu0 %v53
    %176 = vmatprep.subr.mxu0 0.0
    %177 = vmatpush2.msra.mxu0 %v52
    %178 = vmatprep.subr.mxu0 0.0
    %179 = vmatpush2.msra.mxu0 %v51
    %180 = vmatprep.subr.mxu0 0.0
    %181 = vmatpush2.msra.mxu0 %v50
    %182 = vmatprep.subr.mxu0 0.0
    %183 = vmatpush2.msra.mxu0 %v49
    %184 = vmatprep.subr.mxu0 0.0
    %185 = vmatpush2.msra.mxu0 %v48
    %186 = vmatprep.subr.mxu0 0.0
    %187 = vmatpush2.msra.mxu0 %v47
    %188 = vmatprep.mubr.f32.mxu0 %v118
    %189 = vmatmul.mubr.f32.gmra.mxu0 %v110
    %v190 = vpop.f32.mrf.mxu0
    %v191 = vadd.f32 %v100, %v190
    %v192 = vpop.f32.mrf.mxu0
    %193 = vdwg.mxu0
    %194 = vmatprep.subr.mxu0 0.0
    %195 = vmatpush1.msra.mxu0 %v78
    %196 = vmatprep.subr.mxu0 0.0
    %197 = vmatpush1.msra.mxu0 %v77
    %198 = vmatprep.subr.mxu0 0.0
    %199 = vmatpush1.msra.mxu0 %v76
    %200 = vmatprep.subr.mxu0 0.0
    %201 = vmatpush1.msra.mxu0 %v75
    %202 = vmatprep.subr.mxu0 0.0
    %203 = vmatpush1.msra.mxu0 %v74
    %204 = vmatprep.subr.mxu0 0.0
    %205 = vmatpush1.msra.mxu0 %v73
    %206 = vmatprep.subr.mxu0 0.0
    %207 = vmatpush1.msra.mxu0 %v72
    %208 = vmatprep.subr.mxu0 0.0
    %209 = vmatpush1.msra.mxu0 %v71
    %210 = vmatprep.subr.mxu0 0.0
    %211 = vmatpush1.msra.mxu0 %v70
    %212 = vmatprep.subr.mxu0 0.0
    %213 = vmatpush1.msra.mxu0 %v69
    %214 = vmatprep.subr.mxu0 0.0
    %215 = vmatpush1.msra.mxu0 %v68
    %216 = vmatprep.subr.mxu0 0.0
    %217 = vmatpush1.msra.mxu0 %v67
    %218 = vmatprep.subr.mxu0 0.0
    %219 = vmatpush1.msra.mxu0 %v66
    %220 = vmatprep.subr.mxu0 0.0
    %221 = vmatpush1.msra.mxu0 %v65
    %222 = vmatprep.subr.mxu0 0.0
    %223 = vmatpush1.msra.mxu0 %v64
    %224 = vmatprep.subr.mxu0 0.0
    %225 = vmatpush1.msra.mxu0 %v63
    %226 = vmatprep.subr.mxu0 0.0
    %227 = vmatpush2.msra.mxu0 %v94
    %228 = vmatprep.subr.mxu0 0.0
    %229 = vmatpush2.msra.mxu0 %v93
    %230 = vmatprep.subr.mxu0 0.0
    %231 = vmatpush2.msra.mxu0 %v92
    %232 = vmatprep.subr.mxu0 0.0
    %233 = vmatpush2.msra.mxu0 %v91
    %234 = vmatprep.subr.mxu0 0.0
    %235 = vmatpush2.msra.mxu0 %v90
    %236 = vmatprep.subr.mxu0 0.0
    %237 = vmatpush2.msra.mxu0 %v89
    %238 = vmatprep.subr.mxu0 0.0
    %239 = vmatpush2.msra.mxu0 %v88
    %240 = vmatprep.subr.mxu0 0.0
    %241 = vmatpush2.msra.mxu0 %v87
    %242 = vmatprep.subr.mxu0 0.0
    %243 = vmatpush2.msra.mxu0 %v86
    %244 = vmatprep.subr.mxu0 0.0
    %245 = vmatpush2.msra.mxu0 %v85
    %246 = vmatprep.subr.mxu0 0.0
    %247 = vmatpush2.msra.mxu0 %v84
    %248 = vmatprep.subr.mxu0 0.0
    %249 = vmatpush2.msra.mxu0 %v83
    %250 = vmatprep.subr.mxu0 0.0
    %251 = vmatpush2.msra.mxu0 %v82
    %252 = vmatprep.subr.mxu0 0.0
    %253 = vmatpush2.msra.mxu0 %v81
    %254 = vmatprep.subr.mxu0 0.0
    %255 = vmatpush2.msra.mxu0 %v80
    %256 = vmatprep.subr.mxu0 0.0
    %257 = vmatpush2.msra.mxu0 %v79
    %258 = vmatprep.mubr.f32.mxu0 %v119
    %259 = vmatmul.mubr.f32.gmra.mxu0 %v117
    %v260 = vpop.f32.mrf.mxu0
    %v261 = vadd.f32 %v191, %v260
    %v262 = vpop.f32.mrf.mxu0
    %263 = vdwg.mxu0
    %264 = vst [vmem:[%s3] sm:$0x3] %v261
    %vm265 = vcmask 517120
    %266 = vst.msk [vmem:[%s4] sm:$0x3] %vm265, 0.0
    %267 = vst.msk [vmem:[%s4 + $0x2] sm:$0x3] %vm265, 0.0
    %268 = vst.msk [vmem:[%s4 + $0x4] sm:$0x3] %vm265, 0.0
    %s269 = scalar_lea.vmem %s4, 2
    %270 = vst.msk [vmem:[%s269] sm:$0x3] %vm265, %v261
    // Predicated region
    $region18: #{vae_gpt2_forward.1} parent=1 // pred_check
      _
    $region19: #{vae_gpt2_forward.1} parent=1 // pred_check_branch
      %272 = sbr.rel (0) target = $region21
    $region20: #{vae_gpt2_forward.1} parent=1 // pred_region
      _
    $region21: #{vae_gpt2_forward.1} parent=1 // pred_fallthru
      _
    // Predicated region
    $region22: #{vae_gpt2_forward.1} parent=1 // pred_check
      _
    $region23: #{vae_gpt2_forward.1} parent=1 // pred_check_branch
      %274 = sbr.rel (0) target = $region25
    $region24: #{vae_gpt2_forward.1} parent=1 // pred_region
      _
    $region25: #{vae_gpt2_forward.1} parent=1 // pred_fallthru
      _
    // Predicated region
    $region26: #{vae_gpt2_forward.1} parent=1 // pred_check
      _
    $region27: #{vae_gpt2_forward.1} parent=1 // pred_check_branch
      %276 = sbr.rel (0) target = $region29
    $region28: #{vae_gpt2_forward.1} parent=1 // pred_region
      _
    $region29: #{vae_gpt2_forward.1} parent=1 // pred_fallthru
      _
    // Predicated region
    $region30: #{vae_gpt2_forward.1} parent=1 // pred_check
      _
    $region31: #{vae_gpt2_forward.1} parent=1 // pred_check_branch
      %278 = sbr.rel (0) target = $region33
    $region32: #{vae_gpt2_forward.1} parent=1 // pred_region
      _
    $region33: #{vae_gpt2_forward.1} parent=1 // pred_fallthru
      _
    %279 = vsyncpa [#allocation3], 1

</llo_original>
